<compile_context>
chip_gen: v6e
topology: v6e:2x2x1
jax: 0.10.0
libtpu: 0.0.40
codegen_flags: <defaults>
</compile_context>

<pallas_src>
import functools

import jax
import jax.numpy as jnp
from jax import lax
from jax.experimental import pallas as pl
from jax.experimental.pallas import tpu as pltpu

EPS = 1e-8


# ---------------------------------------------------------------------------
# Hardware / tiling configuration
# ---------------------------------------------------------------------------
def _tpu_config():
    """Return (vmem_limit_bytes, num_tensorcores) for the current chip."""
    phys = 128 * 1024 * 1024
    num_tc = 1
    try:
        kind = jax.devices()[0].device_kind.lower()
    except Exception:  # pragma: no cover - defensive
        kind = ""
    if "7" in kind:  # v7x: 2 TensorCores, 64 MiB VMEM per TC
        phys, num_tc = 64 * 1024 * 1024, 2
    try:
        phys = int(getattr(pltpu.get_tpu_info(), "vmem_capacity_bytes", phys))
    except Exception:  # pragma: no cover - defensive
        pass
    if phys <= 64 * 1024 * 1024:
        vmem_limit = 48 * 1024 * 1024   # v7x: leave >=16 MiB headroom
    else:
        vmem_limit = 64 * 1024 * 1024   # v5e/v6e: 128 MiB physical
    return vmem_limit, num_tc


def _pick_tb(m, per_sample_bytes, budget_bytes, num_tc):
    """Batch samples per grid step for the fused path."""
    tb = min(m, max(1, budget_bytes // max(per_sample_bytes, 1)))
    # Only multi-TC chips (v7x) need >=2 "parallel" grid steps; on single-TC
    # v5e/v6e a larger tile just amortizes the ~0.35us/step overhead.
    if num_tc > 1 and m > 1:
        tb = min(tb, max(1, m // num_tc))
    while m % tb:
        tb -= 1
    return tb


def _pick_tk(k, n, in_itemsize, budget_bytes):
    """K-chunk size for the split-K fallback (apply pass dominates VMEM)."""
    bytes_per_col = n * (4 * in_itemsize + 4)   # 2x in + 2x out (dbl-buf) + f32 temp
    max_tk = max(1, budget_bytes // max(bytes_per_col, 1))
    if max_tk >= k:
        return k
    if k % 128:
        # TODO(synk): ragged (non-128-multiple) K chunks would need masking;
        # keep the full length here (may exceed the VMEM budget).
        return k
    tk = max(128, (max_tk // 128) * 128)
    while tk > 128 and k % tk:
        tk -= 128
    return tk


# ---------------------------------------------------------------------------
# Kernels
# ---------------------------------------------------------------------------
def _gln_fused_kernel(y_ref, g_ref, b_ref, o_ref, *, inv_count):
    # y_ref/o_ref: (TB, N, K) in the I/O dtype; g_ref/b_ref: (N, 1) f32.
    y = y_ref[...].astype(jnp.float32)

    # Pass 1: per-sample mean over (channels, length); lanes (K) first.
    mean = jnp.sum(jnp.sum(y, axis=2, keepdims=True),
                   axis=1, keepdims=True) * inv_count              # (TB,1,1)

    # Pass 2 (tile resident, VPU-only): centered variance, no cancellation.
    d = y - mean                                                   # (TB,N,K)
    var = jnp.sum(jnp.sum(d * d, axis=2, keepdims=True),
                  axis=1, keepdims=True) * inv_count               # (TB,1,1)
    inv_std = lax.rsqrt(var + EPS)                                 # EUP slot

    # Folded affine: 2 VPU ops/element in the big sweep.
    scale = g_ref[...] * inv_std                                   # (TB,N,1)
    o_ref[...] = (d * scale + b_ref[...]).astype(o_ref.dtype)


def _gln_stats_kernel(y_ref, s1_ref, s2_ref):
    # y_ref: (1, N, TK); s1/s2: (1, 8, 128) f32 accumulators (resident across K).
    @pl.when(pl.program_id(1) == 0)
    def _():
        s1_ref[...] = jnp.zeros_like(s1_ref)
        s2_ref[...] = jnp.zeros_like(s2_ref)

    y = y_ref[...].astype(jnp.float32)
    s1 = jnp.sum(jnp.sum(y, axis=2, keepdims=True), axis=1, keepdims=True)
    s2 = jnp.sum(jnp.sum(y * y, axis=2, keepdims=True), axis=1, keepdims=True)
    s1_ref[...] += s1
    s2_ref[...] += s2


def _gln_apply_kernel(y_ref, scale_ref, shift_ref, o_ref):
    # y_ref/o_ref: (1, N, TK); scale/shift: (1, N, 1) f32.
    y = y_ref[...].astype(jnp.float32)
    o_ref[...] = (y * scale_ref[...] + shift_ref[...]).astype(o_ref.dtype)


# ---------------------------------------------------------------------------
# Wrappers
# ---------------------------------------------------------------------------
def _gln_split(y, g, b, vmem_limit, budget, tk_override):
    """Split-K fallback: stats sweep + tiny wrapper math + apply sweep."""
    m, n, k = y.shape
    tk = tk_override if tk_override is not None else _pick_tk(
        k, n, y.dtype.itemsize, budget)
    nkk = k // tk

    stats1, stats2 = pl.pallas_call(
        _gln_stats_kernel,
        out_shape=(jax.ShapeDtypeStruct((m, 8, 128), jnp.float32),
                   jax.ShapeDtypeStruct((m, 8, 128), jnp.float32)),
        grid_spec=pltpu.PrefetchScalarGridSpec(
            num_scalar_prefetch=0,
            grid=(m, nkk),
            in_specs=[pl.BlockSpec((1, n, tk), lambda i, j: (i, 0, j))],
            out_specs=[pl.BlockSpec((1, 8, 128), lambda i, j: (i, 0, 0)),
                       pl.BlockSpec((1, 8, 128), lambda i, j: (i, 0, 0))],
        ),
        compiler_params=pltpu.CompilerParams(
            dimension_semantics=("parallel", "arbitrary"),
            vmem_limit_bytes=vmem_limit),
    )(y)

    inv_count = 1.0 / float(n * k)
    mean = stats1[:, 0, 0] * inv_count                               # (M,)
    # TODO(synk): the split path uses one-pass E[x^2]-E[x]^2 to avoid a third
    # full HBM read; can lose precision when |mean| >> std.
    var = jnp.maximum(stats2[:, 0, 0] * inv_count - mean * mean, 0.0)
    inv_std = lax.rsqrt(var + EPS)
    scale = g.reshape(1, n, 1) * inv_std.reshape(m, 1, 1)            # (M,N,1)
    shift = b.reshape(1, n, 1) - mean.reshape(m, 1, 1) * scale       # (M,N,1)

    return pl.pallas_call(
        _gln_apply_kernel,
        out_shape=jax.ShapeDtypeStruct((m, n, k), y.dtype),
        grid_spec=pltpu.PrefetchScalarGridSpec(
            num_scalar_prefetch=0,
            grid=(m, nkk),
            in_specs=[pl.BlockSpec((1, n, tk), lambda i, j: (i, 0, j)),
                      pl.BlockSpec((1, n, 1), lambda i, j: (i, 0, 0)),
                      pl.BlockSpec((1, n, 1), lambda i, j: (i, 0, 0))],
            out_specs=pl.BlockSpec((1, n, tk), lambda i, j: (i, 0, j)),
        ),
        compiler_params=pltpu.CompilerParams(
            dimension_semantics=("parallel", "parallel"),
            vmem_limit_bytes=vmem_limit),
    )(y, scale, shift)


@functools.partial(jax.jit, static_argnames=("force_split", "force_split_tk"))
def global_layer_norm(y, gamma, beta, force_split=False, force_split_tk=None):
    """gLN forward.  y: [M, N, K]; gamma/beta broadcastable to [1, N, 1]."""
    m, n, k = y.shape
    g = jnp.asarray(gamma, jnp.float32).reshape(n, 1)
    b = jnp.asarray(beta, jnp.float32).reshape(n, 1)

    vmem_limit, num_tc = _tpu_config()
    budget = vmem_limit - (4 << 20)            # headroom for compiler scratch
    itemsize = y.dtype.itemsize
    # double-buffered in + double-buffered out (I/O dtype) + two f32 temps.
    per_sample = n * k * (4 * itemsize + 8)

    if force_split or per_sample > budget:
        return _gln_split(y, g, b, vmem_limit, budget, force_split_tk)

    tb = _pick_tb(m, per_sample, budget, num_tc)
    kernel = functools.partial(_gln_fused_kernel, inv_count=1.0 / float(n * k))

    return pl.pallas_call(
        kernel,
        out_shape=jax.ShapeDtypeStruct((m, n, k), y.dtype),
        grid_spec=pltpu.PrefetchScalarGridSpec(
            num_scalar_prefetch=0,
            grid=(m // tb,),
            in_specs=[
                pl.BlockSpec((tb, n, k), lambda i: (i, 0, 0)),
                pl.BlockSpec((n, 1), lambda i: (0, 0)),   # gamma, resident
                pl.BlockSpec((n, 1), lambda i: (0, 0)),   # beta, resident
            ],
            out_specs=pl.BlockSpec((tb, n, k), lambda i: (i, 0, 0)),
        ),
        compiler_params=pltpu.CompilerParams(
            dimension_semantics=("parallel",),
            vmem_limit_bytes=vmem_limit),
    )(y, g, b)


# ---------------------------------------------------------------------------
# Pure-JAX reference (mirrors the PyTorch forward)
# ---------------------------------------------------------------------------
def _reference(y, gamma, beta):
    y = y.astype(jnp.float32)
    mean = jnp.mean(y, axis=(1, 2), keepdims=True)
    var = jnp.mean((y - mean) ** 2, axis=(1, 2), keepdims=True)
    return gamma * (y - mean) / jnp.sqrt(var + EPS) + beta


if __name__ == "__main__":
    # [M, N, K] = [batch, channel_size, length]
    M, N, K = 4, 8, 256

    key = jax.random.PRNGKey(0)
    ky, kg, kb = jax.random.split(key, 3)
    y = jax.random.normal(ky, (M, N, K), dtype=jnp.float32)

    # reset_parameters() gives gamma=1, beta=0; perturb slightly so the affine
    # path is actually exercised by the check.
    gamma = 1.0 + 0.1 * jax.random.normal(kg, (1, N, 1), dtype=jnp.float32)
    beta = 0.1 * jax.random.normal(kb, (1, N, 1), dtype=jnp.float32)

    ref = _reference(y, gamma, beta)

    # Main (fused, single-sweep) path.
    out = jax.block_until_ready(global_layer_norm(y, gamma, beta))
    assert out.shape == ref.shape, (out.shape, ref.shape)
    assert out.dtype == y.dtype, (out.dtype, y.dtype)
    max_err = float(jnp.max(jnp.abs(out - ref)))
    assert jnp.allclose(out, ref, atol=1e-4, rtol=1e-4), max_err

    # Also exercise the split-K fallback (normally only triggered when one
    # sample's block exceeds the VMEM budget, e.g. large N*K on v7x).
    out_split = jax.block_until_ready(
        global_layer_norm(y, gamma, beta, force_split=True, force_split_tk=128))
    max_err_split = float(jnp.max(jnp.abs(out_split - ref)))
    assert jnp.allclose(out_split, ref, atol=1e-4, rtol=1e-4), max_err_split

    print("KERNEL_OK")
</pallas_src>

<mosaic_0001>
module attributes {stable_mosaic.version = 11 : i64} {
  func.func @_gln_fused_kernel(%arg0: i32, %arg1: memref<4x8x256xf32, #tpu.memory_space<vmem>>, %arg2: memref<8x1xf32, #tpu.memory_space<vmem>>, %arg3: memref<8x1xf32, #tpu.memory_space<vmem>>, %arg4: memref<4x8x256xf32, #tpu.memory_space<vmem>>) attributes {dimension_semantics = [#tpu.dimension_semantics<parallel>], iteration_bounds = array<i64: 1>, scalar_prefetch = 0 : i64, scratch_operands = 0 : i64, tpu.core_type = #tpu.core_type<tc>, window_params = [{transform_indices = @transform_0, window_bounds = array<i64: 4, 8, 256>}, {pipeline_mode = #tpu.pipeline_mode<synchronous>, transform_indices = @transform_1, window_bounds = array<i64: 8, 1>}, {pipeline_mode = #tpu.pipeline_mode<synchronous>, transform_indices = @transform_2, window_bounds = array<i64: 8, 1>}, {transform_indices = @transform_3, window_bounds = array<i64: 4, 8, 256>}]} {
    %c0 = arith.constant 0 : index
    %c0_0 = arith.constant 0 : index
    %c0_1 = arith.constant 0 : index
    %0 = vector.load %arg1[%c0, %c0_0, %c0_1] : memref<4x8x256xf32, #tpu.memory_space<vmem>>, vector<4x8x256xf32>
    %cst = arith.constant dense<0.000000e+00> : vector<4x8xf32>
    %1 = vector.multi_reduction <add>, %0, %cst [2] : vector<4x8x256xf32> to vector<4x8xf32>
    %2 = vector.shape_cast %1 : vector<4x8xf32> to vector<4x8x1xf32>
    %cst_2 = arith.constant dense<0.000000e+00> : vector<4x1xf32>
    %3 = vector.multi_reduction <add>, %2, %cst_2 [1] : vector<4x8x1xf32> to vector<4x1xf32>
    %4 = vector.shape_cast %3 : vector<4x1xf32> to vector<4x1x1xf32>
    %cst_3 = arith.constant 4.8828125E-4 : f32
    %5 = vector.broadcast %cst_3 : f32 to vector<4x1x1xf32>
    %6 = arith.mulf %4, %5 : vector<4x1x1xf32>
    %7 = vector.broadcast %6 : vector<4x1x1xf32> to vector<4x8x256xf32>
    %8 = arith.subf %0, %7 : vector<4x8x256xf32>
    %9 = arith.mulf %8, %8 : vector<4x8x256xf32>
    %cst_4 = arith.constant dense<0.000000e+00> : vector<4x8xf32>
    %10 = vector.multi_reduction <add>, %9, %cst_4 [2] : vector<4x8x256xf32> to vector<4x8xf32>
    %11 = vector.shape_cast %10 : vector<4x8xf32> to vector<4x8x1xf32>
    %cst_5 = arith.constant dense<0.000000e+00> : vector<4x1xf32>
    %12 = vector.multi_reduction <add>, %11, %cst_5 [1] : vector<4x8x1xf32> to vector<4x1xf32>
    %13 = vector.shape_cast %12 : vector<4x1xf32> to vector<4x1x1xf32>
    %cst_6 = arith.constant 4.8828125E-4 : f32
    %14 = vector.broadcast %cst_6 : f32 to vector<4x1x1xf32>
    %15 = arith.mulf %13, %14 : vector<4x1x1xf32>
    %cst_7 = arith.constant 9.99999993E-9 : f32
    %16 = vector.broadcast %cst_7 : f32 to vector<4x1x1xf32>
    %17 = arith.addf %15, %16 : vector<4x1x1xf32>
    %18 = math.rsqrt %17 : vector<4x1x1xf32>
    %c0_8 = arith.constant 0 : index
    %c0_9 = arith.constant 0 : index
    %19 = vector.load %arg2[%c0_8, %c0_9] : memref<8x1xf32, #tpu.memory_space<vmem>>, vector<8x1xf32>
    %20 = vector.shape_cast %19 : vector<8x1xf32> to vector<1x8x1xf32>
    %21 = vector.broadcast %20 : vector<1x8x1xf32> to vector<4x8x1xf32>
    %22 = vector.broadcast %18 : vector<4x1x1xf32> to vector<4x8x1xf32>
    %23 = arith.mulf %21, %22 : vector<4x8x1xf32>
    %24 = vector.broadcast %23 : vector<4x8x1xf32> to vector<4x8x256xf32>
    %25 = arith.mulf %8, %24 : vector<4x8x256xf32>
    %c0_10 = arith.constant 0 : index
    %c0_11 = arith.constant 0 : index
    %26 = vector.load %arg3[%c0_10, %c0_11] : memref<8x1xf32, #tpu.memory_space<vmem>>, vector<8x1xf32>
    %27 = vector.shape_cast %26 : vector<8x1xf32> to vector<1x8x1xf32>
    %28 = vector.broadcast %27 : vector<1x8x1xf32> to vector<4x8x256xf32>
    %29 = arith.addf %25, %28 : vector<4x8x256xf32>
    %c0_12 = arith.constant 0 : index
    %c0_13 = arith.constant 0 : index
    %c0_14 = arith.constant 0 : index
    %30 = vector.load %arg4[%c0_12, %c0_13, %c0_14] : memref<4x8x256xf32, #tpu.memory_space<vmem>>, vector<4x8x256xf32>
    tpu.vector_store %arg4[%c0_12, %c0_13, %c0_14], %29 {strides = array<i32>} : memref<4x8x256xf32, #tpu.memory_space<vmem>>, vector<4x8x256xf32>,
    return
  }
  func.func @transform_0(%arg0: i32) -> (i32, i32, i32) {
    %c0_i32 = arith.constant 0 : i32
    %c0_i32_0 = arith.constant 0 : i32
    %c0_i32_1 = arith.constant 0 : i32
    return %arg0, %c0_i32, %c0_i32_0 : i32, i32, i32
  }
  func.func @transform_1(%arg0: i32) -> (i32, i32) {
    %c0_i32 = arith.constant 0 : i32
    %c0_i32_0 = arith.constant 0 : i32
    %c0_i32_1 = arith.constant 0 : i32
    return %c0_i32, %c0_i32_0 : i32, i32
  }
  func.func @transform_2(%arg0: i32) -> (i32, i32) {
    %c0_i32 = arith.constant 0 : i32
    %c0_i32_0 = arith.constant 0 : i32
    %c0_i32_1 = arith.constant 0 : i32
    return %c0_i32, %c0_i32_0 : i32, i32
  }
  func.func @transform_3(%arg0: i32) -> (i32, i32, i32) {
    %c0_i32 = arith.constant 0 : i32
    %c0_i32_0 = arith.constant 0 : i32
    %c0_i32_1 = arith.constant 0 : i32
    return %arg0, %c0_i32, %c0_i32_0 : i32, i32, i32
  }
}

</mosaic_0001>

<llo_original>
// kernel: global_layer_norm.1
$region0: #{global_layer_norm.1}
  #allocation0 [shape = 'u32[]', space=smem, size = 0x4, offset = 0x4, fixed_abs, tag = 'smem constant byte address 0x4 - core index']
  #allocation1 [shape = 'u32[144,128]{1,0:T(1,128)}', space=vmem, size = 0x12000, scoped, tag = 'internal scratch']
  %s0 = inlined_call_operand.hbm [shape: f32[4,8,256], index: 0, kind: input, shape index: {}]
  %s1 = inlined_call_operand.vmem [shape: f32[8,1], index: 1, kind: input, shape index: {}]
  %s2 = inlined_call_operand.vmem [shape: f32[8,1], index: 2, kind: input, shape index: {}]
  %s3 = inlined_call_operand.hbm [shape: f32[4,8,256], index: 3, kind: output, shape index: {}]
  %s4 = sld [smem:[#allocation0]]
  $region26: #{global_layer_norm.1} parent=0
    _
  %s6 = ssub.s32 1, %s4
  %s7 = scalar_select 0, %s6, %s4
  $region1: #{global_layer_norm.1} parent=0
    #allocation2 [shape = 'u8[32768]{0}', space=vmem, size = 0x8000, scoped, tag = 'input window, operand 0, single buffered']
    #allocation3 [shape = 's32[1]{0}', space=sflag, size = 0x4, scoped, tag = 'scoped memory for global_layer_norm.1']
    #allocation4 [shape = 's32[1]{0}', space=sflag, size = 0x4, scoped, tag = 'scoped memory for global_layer_norm.1']
    #allocation5 [shape = 'u8[32768]{0}', space=vmem, size = 0x8000, scoped, tag = 'output window, operand 0, single buffered']
    %8 = vsyncpa [#allocation3], 0
    %9 = vsyncpa [#allocation4], 0
    // Predicated region
    $region2: #{global_layer_norm.1} parent=1 // pred_check
      _
    $region3: #{global_layer_norm.1} parent=1 // pred_check_branch
      %11 = sbr.rel (0) target = $region5
    $region4: #{global_layer_norm.1} parent=1 // pred_region
      %s13 = ssub.s32 1024, 1024
      %14 = vsyncadd [#allocation3], %s13
      %s15 = sshll.u32 [#allocation2], 4
      %s16 = int_to_ptr.vmem [resolvable:$true] %s15
      %21 = dma.hbm_to_vmem [thread:$0]  %s0, 1024, %s16, [#allocation3], 256, 256, 16
    $region5: #{global_layer_norm.1} parent=1 // pred_fallthru
      _
    // Predicated region
    $region6: #{global_layer_norm.1} parent=1 // pred_check
      _
    $region7: #{global_layer_norm.1} parent=1 // pred_check_branch
      %23 = sbr.rel (0) target = $region9
    $region8: #{global_layer_norm.1} parent=1 // pred_region
      _
    $region9: #{global_layer_norm.1} parent=1 // pred_fallthru
      _
    // Predicated region
    $region10: #{global_layer_norm.1} parent=1 // pred_check
      _
    $region11: #{global_layer_norm.1} parent=1 // pred_check_branch
      %25 = sbr.rel (0) target = $region13
    $region12: #{global_layer_norm.1} parent=1 // pred_region
      _
    $region13: #{global_layer_norm.1} parent=1 // pred_fallthru
      _
    // Predicated region
    $region14: #{global_layer_norm.1} parent=1 // pred_check
      _
    $region15: #{global_layer_norm.1} parent=1 // pred_check_branch
      %27 = sbr.rel (0) target = $region17
    $region16: #{global_layer_norm.1} parent=1 // pred_region
      %28 = dma.done [#allocation3], 1024
    $region17: #{global_layer_norm.1} parent=1 // pred_fallthru
      _
    %v29 = vld [vmem:[#allocation2] sm:$0xff]
    %v30 = vld [vmem:[#allocation2 + $0x8] sm:$0xff]
    %v31 = vld [vmem:[#allocation2 + $0x10] sm:$0xff]
    %v32 = vld [vmem:[#allocation2 + $0x18] sm:$0xff]
    %v33 = vld [vmem:[#allocation2 + $0x20] sm:$0xff]
    %v34 = vld [vmem:[#allocation2 + $0x28] sm:$0xff]
    %v35 = vld [vmem:[#allocation2 + $0x30] sm:$0xff]
    %v36 = vld [vmem:[#allocation2 + $0x38] sm:$0xff]
    %v37 = vadd.f32 %v29, %v30
    %38 = vadd.xlane.f32.xlu0 %v37
    %v39 = vpop.xlane.xlu0 %38
    %v40 = vadd.f32 %v31, %v32
    %41 = vadd.xlane.f32.xlu0 %v40
    %v42 = vpop.xlane.xlu0 %41
    %v43 = vadd.f32 %v33, %v34
    %44 = vadd.xlane.f32.xlu0 %v43
    %v45 = vpop.xlane.xlu0 %44
    %v46 = vadd.f32 %v35, %v36
    %47 = vadd.xlane.f32.xlu0 %v46
    %v48 = vpop.xlane.xlu0 %47
    %v49 = vrot.slane %v39, 4
    %v50 = vadd.f32 %v39, %v49
    %v51 = vrot.slane %v50, 2
    %v52 = vadd.f32 %v50, %v51
    %v53 = vrot.slane %v52, 1
    %v54 = vadd.f32 %v52, %v53
    %v55 = vrot.slane %v42, 4
    %v56 = vadd.f32 %v42, %v55
    %v57 = vrot.slane %v56, 2
    %v58 = vadd.f32 %v56, %v57
    %v59 = vrot.slane %v58, 1
    %v60 = vadd.f32 %v58, %v59
    %v61 = vrot.slane %v45, 4
    %v62 = vadd.f32 %v45, %v61
    %v63 = vrot.slane %v62, 2
    %v64 = vadd.f32 %v62, %v63
    %v65 = vrot.slane %v64, 1
    %v66 = vadd.f32 %v64, %v65
    %v67 = vrot.slane %v48, 4
    %v68 = vadd.f32 %v48, %v67
    %v69 = vrot.slane %v68, 2
    %v70 = vadd.f32 %v68, %v69
    %v71 = vrot.slane %v70, 1
    %v72 = vadd.f32 %v70, %v71
    %v73 = vmul.f32 %v54, 0.00048828125
    %v74 = vmul.f32 %v60, 0.00048828125
    %v75 = vmul.f32 %v66, 0.00048828125
    %v76 = vmul.f32 %v72, 0.00048828125
    %v77 = vsub.f32 %v29, %v73
    %v78 = vsub.f32 %v30, %v73
    %v79 = vsub.f32 %v31, %v74
    %v80 = vsub.f32 %v32, %v74
    %v81 = vsub.f32 %v33, %v75
    %v82 = vsub.f32 %v34, %v75
    %v83 = vsub.f32 %v35, %v76
    %v84 = vsub.f32 %v36, %v76
    %v85 = vmul.f32 %v77, %v77
    %v86 = vmul.f32 %v78, %v78
    %v87 = vmul.f32 %v79, %v79
    %v88 = vmul.f32 %v80, %v80
    %v89 = vmul.f32 %v81, %v81
    %v90 = vmul.f32 %v82, %v82
    %v91 = vmul.f32 %v83, %v83
    %v92 = vmul.f32 %v84, %v84
    %v93 = vadd.f32 %v85, %v86
    %94 = vadd.xlane.f32.xlu0 %v93
    %v95 = vpop.xlane.xlu0 %94
    %v96 = vadd.f32 %v87, %v88
    %97 = vadd.xlane.f32.xlu0 %v96
    %v98 = vpop.xlane.xlu0 %97
    %v99 = vadd.f32 %v89, %v90
    %100 = vadd.xlane.f32.xlu0 %v99
    %v101 = vpop.xlane.xlu0 %100
    %v102 = vadd.f32 %v91, %v92
    %103 = vadd.xlane.f32.xlu0 %v102
    %v104 = vpop.xlane.xlu0 %103
    %v105 = vrot.slane %v95, 4
    %v106 = vadd.f32 %v95, %v105
    %v107 = vrot.slane %v106, 2
    %v108 = vadd.f32 %v106, %v107
    %v109 = vrot.slane %v108, 1
    %v110 = vadd.f32 %v108, %v109
    %v111 = vrot.slane %v98, 4
    %v112 = vadd.f32 %v98, %v111
    %v113 = vrot.slane %v112, 2
    %v114 = vadd.f32 %v112, %v113
    %v115 = vrot.slane %v114, 1
    %v116 = vadd.f32 %v114, %v115
    %v117 = vrot.slane %v101, 4
    %v118 = vadd.f32 %v101, %v117
    %v119 = vrot.slane %v118, 2
    %v120 = vadd.f32 %v118, %v119
    %v121 = vrot.slane %v120, 1
    %v122 = vadd.f32 %v120, %v121
    %v123 = vrot.slane %v104, 4
    %v124 = vadd.f32 %v104, %v123
    %v125 = vrot.slane %v124, 2
    %v126 = vadd.f32 %v124, %v125
    %v127 = vrot.slane %v126, 1
    %v128 = vadd.f32 %v126, %v127
    %v129 = vmul.f32 %v110, 0.00048828125
    %v130 = vmul.f32 %v116, 0.00048828125
    %v131 = vmul.f32 %v122, 0.00048828125
    %v132 = vmul.f32 %v128, 0.00048828125
    %v133 = vadd.f32 %v129, 1e-08
    %v134 = vadd.f32 %v130, 1e-08
    %v135 = vadd.f32 %v131, 1e-08
    %v136 = vadd.f32 %v132, 1e-08
    %v137 = vrsqrt.pop %v133
    %v138 = vrsqrt.pop %v134
    %v139 = vrsqrt.pop %v135
    %v140 = vrsqrt.pop %v136
    %v141 = vld [vmem:[%s1] sm:$0xff]
    %v142 = vmul.f32 %v141, %v137
    %v143 = vmul.f32 %v141, %v138
    %v144 = vmul.f32 %v141, %v139
    %v145 = vmul.f32 %v141, %v140
    %147 = vset.pattern.permute.xlu0 0
    %148 = vperm.xlu0 %147, %v142
    %v149 = vpop.permute.xlu0 %148
    %152 = vset.pattern.permute.xlu0 0
    %153 = vperm.xlu0 %152, %v143
    %v154 = vpop.permute.xlu0 %153
    %157 = vset.pattern.permute.xlu0 0
    %158 = vperm.xlu0 %157, %v144
    %v159 = vpop.permute.xlu0 %158
    %162 = vset.pattern.permute.xlu0 0
    %163 = vperm.xlu0 %162, %v145
    %v164 = vpop.permute.xlu0 %163
    %v166 = vmul.f32 %v77, %v149
    %v167 = vmul.f32 %v78, %v149
    %v168 = vmul.f32 %v79, %v154
    %v169 = vmul.f32 %v80, %v154
    %v170 = vmul.f32 %v81, %v159
    %v171 = vmul.f32 %v82, %v159
    %v172 = vmul.f32 %v83, %v164
    %v173 = vmul.f32 %v84, %v164
    %v174 = vld [vmem:[%s2] sm:$0xff]
    %176 = vset.pattern.permute.xlu0 0
    %177 = vperm.xlu0 %176, %v174
    %v178 = vpop.permute.xlu0 %177
    %v180 = vadd.f32 %v166, %v178
    %v181 = vadd.f32 %v167, %v178
    %v182 = vadd.f32 %v168, %v178
    %v183 = vadd.f32 %v169, %v178
    %v184 = vadd.f32 %v170, %v178
    %v185 = vadd.f32 %v171, %v178
    %v186 = vadd.f32 %v172, %v178
    %v187 = vadd.f32 %v173, %v178
    %188 = vst [vmem:[#allocation5] sm:$0xff] %v180
    %189 = vst [vmem:[#allocation5 + $0x8] sm:$0xff] %v181
    %190 = vst [vmem:[#allocation5 + $0x10] sm:$0xff] %v182
    %191 = vst [vmem:[#allocation5 + $0x18] sm:$0xff] %v183
    %192 = vst [vmem:[#allocation5 + $0x20] sm:$0xff] %v184
    %193 = vst [vmem:[#allocation5 + $0x28] sm:$0xff] %v185
    %194 = vst [vmem:[#allocation5 + $0x30] sm:$0xff] %v186
    %195 = vst [vmem:[#allocation5 + $0x38] sm:$0xff] %v187
    // Predicated region
    $region18: #{global_layer_norm.1} parent=1 // pred_check
      _
    $region19: #{global_layer_norm.1} parent=1 // pred_check_branch
      %197 = sbr.rel (0) target = $region21
    $region20: #{global_layer_norm.1} parent=1 // pred_region
      %s199 = ssub.s32 1024, 1024
      %200 = vsyncadd [#allocation4], %s199
      %s201 = sshll.u32 [#allocation5], 4
      %s202 = int_to_ptr.vmem [resolvable:$true] %s201
      %207 = dma.vmem_to_hbm [thread:$0]  %s202, 1024, %s3, [#allocation4], 256, 256, 16
    $region21: #{global_layer_norm.1} parent=1 // pred_fallthru
      _
    // Predicated region
    $region22: #{global_layer_norm.1} parent=1 // pred_check
      _
    $region23: #{global_layer_norm.1} parent=1 // pred_check_branch
      %209 = sbr.rel (0) target = $region25
    $region24: #{global_layer_norm.1} parent=1 // pred_region
      %210 = dma.done [#allocation4], 1024
    $region25: #{global_layer_norm.1} parent=1 // pred_fallthru
      _
    %211 = vsyncpa [#allocation3], 1
    %212 = vsyncpa [#allocation4], 1

</llo_original>
